<compile_context>
chip_gen: v7x
topology: tpu7x:2x2x1
jax: 0.10.0
libtpu: 0.0.40
codegen_flags: <defaults>
</compile_context>

<pallas_src>
import functools

import jax
import jax.numpy as jnp
from jax.experimental import pallas as pl
from jax.experimental.pallas import tpu as pltpu

_LANE = 128
# (1024, 128) f32 tile = 512 KiB per buffer; with double-buffered in+out
# this is ~2 MiB of VMEM, comfortably inside the scoped defaults on
# v5e (16 MiB), v6e (32 MiB) and v7x (32 MiB of 64 MiB physical).
_MAX_BLOCK_ROWS = 1024


def _clip_boxes_kernel(boxes_ref, out_ref, *, height, width):
    b = boxes_ref[...]                                     # (block_rows, 128)
    dt = b.dtype

    # Lane -> coordinate index.  Bounds are built once as a (1, 128) constant
    # and broadcast over the rows (hoisted out of the per-element data path).
    lane = jax.lax.broadcasted_iota(jnp.int32, (1, b.shape[-1]), dimension=1)
    coord = lane % 4

    neg_inf = jnp.array(-jnp.inf, dtype=dt)
    pos_inf = jnp.array(jnp.inf, dtype=dt)
    zero = jnp.array(0.0, dtype=dt)
    w_max = jnp.array(width - 1, dtype=dt)
    h_max = jnp.array(height - 1, dtype=dt)

    lo = jnp.where(coord < 2, zero, neg_inf)               # x1, y1: min = 0
    hi = jnp.where(coord == 2, w_max,                      # x2: max = W-1
                   jnp.where(coord == 3, h_max, pos_inf))  # y2: max = H-1

    out_ref[...] = jnp.minimum(jnp.maximum(b, lo), hi)


def clip_boxes(boxes, img):
    """Functional equivalent of ClipBoxes.forward(boxes, img)."""
    B, C, H, W = img.shape
    Bb, N, four = boxes.shape
    assert Bb == B and four == 4

    total = B * N * 4
    rows = pl.cdiv(total, _LANE)
    if rows <= _MAX_BLOCK_ROWS:
        # Single block equal to the full (rows, 128) array (exempt from the
        # (8, 128) divisibility rule).
        block_rows = rows
        padded_rows = rows
    else:
        block_rows = _MAX_BLOCK_ROWS
        padded_rows = pl.cdiv(rows, block_rows) * block_rows
    padded_total = padded_rows * _LANE

    flat = boxes.reshape(-1)
    if padded_total != total:
        flat = jnp.pad(flat, (0, padded_total - total))
    flat = flat.reshape(padded_rows, _LANE)

    num_blocks = padded_rows // block_rows
    out = pl.pallas_call(
        functools.partial(_clip_boxes_kernel, height=H, width=W),
        out_shape=jax.ShapeDtypeStruct(flat.shape, flat.dtype),
        grid=(num_blocks,),
        in_specs=[pl.BlockSpec((block_rows, _LANE), lambda i: (i, 0))],
        out_specs=pl.BlockSpec((block_rows, _LANE), lambda i: (i, 0)),
        input_output_aliases={0: 0},  # flat is a fresh temp -> safe to donate
        compiler_params=pltpu.CompilerParams(
            dimension_semantics=("parallel",)),
    )(flat)

    # Drop padding lanes before restoring the (B, N, 4) view.
    return out.reshape(-1)[:total].reshape(B, N, 4)


if __name__ == "__main__":
    key = jax.random.PRNGKey(0)
    k_boxes, k_img = jax.random.split(key)

    B, N = 2, 8
    C, H, W = 4, 16, 16

    # Boxes spread well outside [0, W-1] x [0, H-1] so clipping is exercised.
    boxes = jax.random.uniform(k_boxes, (B, N, 4), dtype=jnp.float32,
                               minval=-10.0, maxval=30.0)
    img = jax.random.normal(k_img, (B, C, H, W), dtype=jnp.float32)

    out = clip_boxes(boxes, img)
    jax.block_until_ready(out)

    # Pure-JAX reference check (no deprecated a_min/a_max kwargs).
    ref = jnp.stack([
        jnp.maximum(boxes[:, :, 0], 0.0),
        jnp.maximum(boxes[:, :, 1], 0.0),
        jnp.minimum(boxes[:, :, 2], float(W - 1)),
        jnp.minimum(boxes[:, :, 3], float(H - 1)),
    ], axis=-1)
    assert jnp.allclose(out, ref), "mismatch vs reference"

    print("KERNEL_OK")
</pallas_src>

<mosaic_0001>
module attributes {stable_mosaic.version = 11 : i64} {
  func.func @_clip_boxes_kernel(%arg0: i32, %arg1: memref<1x128xf32, #tpu.memory_space<vmem>>, %arg2: memref<1x128xf32, #tpu.memory_space<vmem>>) attributes {dimension_semantics = [#tpu.dimension_semantics<parallel>], iteration_bounds = array<i64: 1>, scalar_prefetch = 0 : i64, scratch_operands = 0 : i64, tpu.core_type = #tpu.core_type<tc>, window_params = [{transform_indices = @transform_0, window_bounds = array<i64: 1, 128>}, {transform_indices = @transform_1, window_bounds = array<i64: 1, 128>}]} {
    %c0 = arith.constant 0 : index
    %c0_0 = arith.constant 0 : index
    %0 = vector.load %arg1[%c0, %c0_0] : memref<1x128xf32, #tpu.memory_space<vmem>>, vector<1x128xf32>
    %1 = tpu.iota {dimensions = array<i32: 1>} : vector<1x128xi32>
    %c4_i32 = arith.constant 4 : i32
    %c0_i32 = arith.constant 0 : i32
    %2 = arith.cmpi eq, %c4_i32, %c0_i32 : i32
    %c1_i32 = arith.constant 1 : i32
    %3 = arith.select %2, %c1_i32, %c4_i32 : i32
    %4 = vector.broadcast %3 : i32 to vector<1x128xi32>
    %5 = arith.remsi %1, %4 : vector<1x128xi32>
    %c0_i32_1 = arith.constant 0 : i32
    %6 = vector.broadcast %c0_i32_1 : i32 to vector<1x128xi32>
    %7 = arith.cmpi ne, %5, %6 : vector<1x128xi32>
    %c0_i32_2 = arith.constant 0 : i32
    %8 = vector.broadcast %c0_i32_2 : i32 to vector<1x128xi32>
    %9 = arith.cmpi slt, %5, %8 : vector<1x128xi32>
    %c0_i32_3 = arith.constant 0 : i32
    %10 = arith.cmpi slt, %3, %c0_i32_3 : i32
    %11 = vector.broadcast %10 : i1 to vector<1x128xi1>
    %12 = vector.broadcast %11 : vector<1x128xi1> to vector<1x128xi1>
    %13 = arith.xori %9, %12 : vector<1x128xi1>
    %14 = arith.andi %13, %7 : vector<1x128xi1>
    %15 = vector.broadcast %3 : i32 to vector<1x128xi32>
    %16 = arith.addi %5, %15 : vector<1x128xi32>
    %17 = arith.select %14, %16, %5 : vector<1x128xi1>, vector<1x128xi32>
    %c2_i32 = arith.constant 2 : i32
    %18 = vector.broadcast %c2_i32 : i32 to vector<1x128xi32>
    %19 = arith.cmpi slt, %17, %18 : vector<1x128xi32>
    %cst = arith.constant 0.000000e+00 : f32
    %cst_4 = arith.constant 0xFF800000 : f32
    %20 = vector.broadcast %cst : f32 to vector<1x128xf32>
    %21 = vector.broadcast %cst_4 : f32 to vector<1x128xf32>
    %22 = arith.select %19, %20, %21 : vector<1x128xi1>, vector<1x128xf32>
    %c2_i32_5 = arith.constant 2 : i32
    %23 = vector.broadcast %c2_i32_5 : i32 to vector<1x128xi32>
    %24 = arith.cmpi eq, %17, %23 : vector<1x128xi32>
    %c3_i32 = arith.constant 3 : i32
    %25 = vector.broadcast %c3_i32 : i32 to vector<1x128xi32>
    %26 = arith.cmpi eq, %17, %25 : vector<1x128xi32>
    %cst_6 = arith.constant 1.500000e+01 : f32
    %cst_7 = arith.constant 0x7F800000 : f32
    %27 = vector.broadcast %cst_6 : f32 to vector<1x128xf32>
    %28 = vector.broadcast %cst_7 : f32 to vector<1x128xf32>
    %29 = arith.select %26, %27, %28 : vector<1x128xi1>, vector<1x128xf32>
    %cst_8 = arith.constant 1.500000e+01 : f32
    %30 = vector.broadcast %cst_8 : f32 to vector<1x128xf32>
    %31 = arith.select %24, %30, %29 : vector<1x128xi1>, vector<1x128xf32>
    %32 = arith.maximumf %0, %22 : vector<1x128xf32>
    %33 = arith.minimumf %32, %31 : vector<1x128xf32>
    %c0_9 = arith.constant 0 : index
    %c0_10 = arith.constant 0 : index
    %34 = vector.load %arg2[%c0_9, %c0_10] : memref<1x128xf32, #tpu.memory_space<vmem>>, vector<1x128xf32>
    tpu.vector_store %arg2[%c0_9, %c0_10], %33 {strides = array<i32>} : memref<1x128xf32, #tpu.memory_space<vmem>>, vector<1x128xf32>,
    return
  }
  func.func @transform_0(%arg0: i32) -> (i32, i32) {
    %c0_i32 = arith.constant 0 : i32
    %c0_i32_0 = arith.constant 0 : i32
    return %arg0, %c0_i32 : i32, i32
  }
  func.func @transform_1(%arg0: i32) -> (i32, i32) {
    %c0_i32 = arith.constant 0 : i32
    %c0_i32_0 = arith.constant 0 : i32
    return %arg0, %c0_i32 : i32, i32
  }
}

</mosaic_0001>

<llo_original>
// kernel: tpu_custom_call.1
$region0: #{tpu_custom_call.1}
  #allocation0 [shape = 'u32[]', space=smem, size = 0x4, offset = 0x4, fixed_abs, tag = 'smem constant byte address 0x4 - core index']
  #allocation1 [shape = 'u32[144,128]{1,0:T(1,128)}', space=vmem, size = 0x12000, scoped, tag = 'internal scratch']
  %s0 = inlined_call_operand.hbm [shape: f32[1,128], index: 0, kind: input, shape index: {}, may-alias: {0,1}]
  %s1 = inlined_call_operand.hbm [shape: f32[1,128], index: 1, kind: output, shape index: {}, may-alias: {0,1}]
  %s2 = sld [smem:[#allocation0]]
  $region18: #{tpu_custom_call.1} parent=0
    _
  %s4 = ssub.s32 1, %s2
  %s5 = scalar_select 0, %s4, %s2
  $region1: #{tpu_custom_call.1} parent=0
    #allocation2 [shape = 'u8[512]{0}', space=vmem, size = 0x400, scoped, tag = 'input window, operand 0, single buffered']
    #allocation3 [shape = 's32[1]{0}', space=sflag, size = 0x4, scoped, tag = 'scoped memory for tpu_custom_call.1']
    #allocation4 [shape = 's32[1]{0}', space=sflag, size = 0x4, scoped, tag = 'scoped memory for tpu_custom_call.1']
    #allocation5 [shape = 'u8[512]{0}', space=vmem, size = 0x400, scoped, tag = 'output window, operand 0, single buffered']
    %6 = vsyncpa [#allocation3], 0
    %7 = vsyncpa [#allocation4], 0
    // Predicated region
    $region2: #{tpu_custom_call.1} parent=1 // pred_check
      _
    $region3: #{tpu_custom_call.1} parent=1 // pred_check_branch
      %9 = sbr.rel (0) target = $region5
    $region4: #{tpu_custom_call.1} parent=1 // pred_region
      %s11 = ssub.s32 16, 16
      %12 = vsyncadd [#allocation3], %s11
      %s14 = sshll.u32 [#allocation2], 4
      %s15 = int_to_ptr.vmem [resolvable:$true] %s14
      %17 = dma.hbm_to_vmem [thread:$0]  %s0, 16, %s15, [#allocation3]
    $region5: #{tpu_custom_call.1} parent=1 // pred_fallthru
      _
    // Predicated region
    $region6: #{tpu_custom_call.1} parent=1 // pred_check
      _
    $region7: #{tpu_custom_call.1} parent=1 // pred_check_branch
      %19 = sbr.rel (0) target = $region9
    $region8: #{tpu_custom_call.1} parent=1 // pred_region
      %20 = dma.done [#allocation3], 16
    $region9: #{tpu_custom_call.1} parent=1 // pred_fallthru
      _
    %v21 = vld [vmem:[#allocation2] sm:$0x1]
    %v22 = vlaneseq
    %v23 = vand.u32 %v22, 127
    %vm24 = vcmp.lt.s32.totalorder %v23, 0
    %v25 = vsub.s32 0, %v23
    %v26 = vsel %vm24, %v25, %v23
    %v27 = vshrl.u32 %v26, 2
    %v28 = vand.u32 %v26, 3
    %v29 = vsub.s32 0, %v28
    %v30 = vsel %vm24, %v29, %v28
    %vm31 = vcmp.ne.s32.totalorder %v30, 0
    %vm32 = vcmp.lt.s32.totalorder %v30, 0
    %vm33 = vmand %vm32, %vm31
    %v34 = vadd.s32 %v30, 4
    %v35 = vsel %vm33, %v34, %v30
    %vm36 = vcmp.lt.s32.totalorder %v35, 2
    %v37 = vsel %vm36, 0.0, -inf
    %vm38 = vcmp.eq.s32.totalorder %v35, 2
    %vm39 = vcmp.eq.s32.totalorder %v35, 3
    %v40 = vsel %vm39, 15.0, inf
    %v41 = vsel %vm38, 15.0, %v40
    %v42 = vmax.f32 %v21, %v37
    %v43 = vmin.f32 %v42, %v41
    %44 = vst [vmem:[#allocation5] sm:$0x1] %v43
    // Predicated region
    $region10: #{tpu_custom_call.1} parent=1 // pred_check
      _
    $region11: #{tpu_custom_call.1} parent=1 // pred_check_branch
      %46 = sbr.rel (0) target = $region13
    $region12: #{tpu_custom_call.1} parent=1 // pred_region
      %s48 = ssub.s32 16, 16
      %49 = vsyncadd [#allocation4], %s48
      %s51 = sshll.u32 [#allocation5], 4
      %s52 = int_to_ptr.vmem [resolvable:$true] %s51
      %54 = dma.vmem_to_hbm [thread:$0]  %s52, 16, %s1, [#allocation4]
    $region13: #{tpu_custom_call.1} parent=1 // pred_fallthru
      _
    // Predicated region
    $region14: #{tpu_custom_call.1} parent=1 // pred_check
      _
    $region15: #{tpu_custom_call.1} parent=1 // pred_check_branch
      %56 = sbr.rel (0) target = $region17
    $region16: #{tpu_custom_call.1} parent=1 // pred_region
      %57 = dma.done [#allocation4], 16
    $region17: #{tpu_custom_call.1} parent=1 // pred_fallthru
      _
    %58 = vsyncpa [#allocation3], 1
    %59 = vsyncpa [#allocation4], 1

</llo_original>
